<compile_context>
chip_gen: v6e
topology: v6e:2x2x1
jax: 0.10.0
libtpu: 0.0.40
codegen_flags: <defaults>
</compile_context>

<pallas_src>
import jax
import jax.numpy as jnp
from jax import lax
from jax.experimental import pallas as pl
from jax.experimental.pallas import tpu as pltpu


def _round_up(x, m):
    return (x + m - 1) // m * m


def _make_kernel(B, HW, Cpad, Npad):
    """Single-invocation kernel: fused im2col-conv matmul + ReLU + GAP + head."""

    def kernel(patches_ref, wconv_ref, bconv_ref, whead_ref, bhead_ref,
               out_ref, feat_ref):
        # --- feature extractor: conv3x3 as ONE im2col MXU matmul -------------
        # (B*H*W, Kpad) bf16 @ (Kpad, Cpad) bf16 -> f32 accumulator
        acc = jnp.dot(patches_ref[...], wconv_ref[...],
                      preferred_element_type=jnp.float32)
        acc = jnp.maximum(acc + bconv_ref[...], 0.0)          # bias + ReLU (f32)
        # global average pool: one fused reduce over the spatial axis
        feats = jnp.mean(acc.reshape(B, HW, Cpad), axis=1)    # (B, Cpad) f32
        feat_ref[...] = feats
        # --- head -------------------------------------------------------------
        # TODO(synk): nn.Dropout(p=0.2) is identity at inference; not applied.
        out_ref[...] = (jnp.dot(feats.astype(jnp.bfloat16), whead_ref[...],
                                preferred_element_type=jnp.float32)
                        + bhead_ref[...])                     # (B, Npad) f32

    return kernel


def custom_model_forward(x_nchw, params):
    """x_nchw: (B, Cin, H, W) float32. Returns (logits, features)."""
    wconv, bconv, whead, bhead = params                # (3,3,Cin,Cemb), (Cemb,), (Cemb,N), (N,)
    B, Cin, H, W = x_nchw.shape
    Cemb = wconv.shape[-1]
    num_classes = whead.shape[-1]
    HW = H * W
    K = 9 * Cin
    Mrows = B * HW                                     # 512 -> multiple of 8 sublanes

    Kpad = _round_up(K, 128)                           # lane-dense contraction dim
    Cpad = _round_up(Cemb, 128)                        # lane-dense features
    Npad = _round_up(num_classes, 128)                 # 196 -> 256 logits

    # --- wrapper-side im2col: NCHW -> NHWC, zero-pad=1, 9 shifted views -------
    # concatenated along channels in (dy, dx, cin) order, matching
    # wconv.reshape(9*Cin, Cemb) row order exactly.
    x_nhwc = jnp.transpose(x_nchw, (0, 2, 3, 1)).astype(jnp.float32)
    xpad = jnp.pad(x_nhwc, ((0, 0), (1, 1), (1, 1), (0, 0)))
    taps = [xpad[:, dy:dy + H, dx:dx + W, :]
            for dy in range(3) for dx in range(3)]
    patches = jnp.concatenate(taps, axis=-1).reshape(Mrows, K)
    patches = jnp.pad(patches, ((0, 0), (0, Kpad - K))).astype(jnp.bfloat16)

    # --- weights: single contiguous lane-dense slabs, bf16 MXU operands -------
    wconv_mat = jnp.pad(wconv.reshape(K, Cemb).astype(jnp.float32),
                        ((0, Kpad - K), (0, Cpad - Cemb))).astype(jnp.bfloat16)
    bconv_row = jnp.pad(bconv.astype(jnp.float32),
                        (0, Cpad - Cemb)).reshape(1, Cpad)
    whead_mat = jnp.pad(whead.astype(jnp.float32),
                        ((0, Cpad - Cemb), (0, Npad - num_classes))
                        ).astype(jnp.bfloat16)
    bhead_row = jnp.pad(bhead.astype(jnp.float32),
                        (0, Npad - num_classes)).reshape(1, Npad)

    kernel = _make_kernel(B, HW, Cpad, Npad)
    vmem = pl.BlockSpec(memory_space=pltpu.MemorySpace.VMEM)

    flops = 2 * Mrows * Kpad * Cpad + 2 * B * Cpad * Npad
    bytes_accessed = (patches.size * 2 + wconv_mat.size * 2 + whead_mat.size * 2
                      + bconv_row.size * 4 + bhead_row.size * 4
                      + B * (Npad + Cpad) * 4)

    out_pad, feat_pad = pl.pallas_call(
        kernel,
        out_shape=(jax.ShapeDtypeStruct((B, Npad), jnp.float32),
                   jax.ShapeDtypeStruct((B, Cpad), jnp.float32)),
        in_specs=[vmem, vmem, vmem, vmem, vmem],
        out_specs=(vmem, vmem),
        compiler_params=pltpu.CompilerParams(
            vmem_limit_bytes=32 * 1024 * 1024),
        cost_estimate=pl.CostEstimate(flops=flops, transcendentals=0,
                                      bytes_accessed=bytes_accessed),
    )(patches, wconv_mat, bconv_row, whead_mat, bhead_row)

    # slice the lane-dense padded slabs back to the logical widths
    return out_pad[:, :num_classes], feat_pad[:, :Cemb]


if __name__ == "__main__":
    key = jax.random.PRNGKey(0)
    kx, kw, kb, kwh, kbh = jax.random.split(key, 5)

    # Small shapes consistent with the module's forward
    B, Cin, H, W = 2, 4, 16, 16
    Cemb = 32                 # synthetic MODEL_NAME_TO_EMBEDDING_DIM[model_name]
    num_classes = 196         # module default

    x = jax.random.normal(kx, (B, Cin, H, W), dtype=jnp.float32)

    # Deterministic synthetic parameters (no checkpoint loading).
    # NOTE: layout is (kH, kW, Cin, Cout); a real PyTorch Conv2d checkpoint
    # (Cout, Cin, kH, kW) must be permuted to this layout before use.
    wconv = jax.random.normal(kw, (3, 3, Cin, Cemb), dtype=jnp.float32) * 0.1
    bconv = jax.random.normal(kb, (Cemb,), dtype=jnp.float32) * 0.01
    whead = jax.random.normal(kwh, (Cemb, num_classes), dtype=jnp.float32) * 0.1
    bhead = jax.random.normal(kbh, (num_classes,), dtype=jnp.float32) * 0.01

    fwd = jax.jit(custom_model_forward)
    out, feats = fwd(x, (wconv, bconv, whead, bhead))
    jax.block_until_ready((out, feats))

    assert out.shape == (B, num_classes)
    assert feats.shape == (B, Cemb)

    # Pure-JAX reference (f32) — loose tolerance since kernel uses bf16 operands
    ref_conv = lax.conv_general_dilated(
        jnp.transpose(x, (0, 2, 3, 1)), wconv,
        window_strides=(1, 1), padding=((1, 1), (1, 1)),
        dimension_numbers=("NHWC", "HWIO", "NHWC"))
    ref_act = jnp.maximum(ref_conv + bconv, 0.0)
    ref_feats = jnp.mean(ref_act, axis=(1, 2))
    ref_out = ref_feats @ whead + bhead
    assert jnp.allclose(feats, ref_feats, atol=5e-2, rtol=5e-2)
    assert jnp.allclose(out, ref_out, atol=5e-2, rtol=5e-2)

    print("KERNEL_OK")
</pallas_src>

<mosaic_0001>
module attributes {stable_mosaic.version = 11 : i64} {
  func.func @kernel(%arg0: memref<512x128xbf16, #tpu.memory_space<vmem>>, %arg1: memref<128x128xbf16, #tpu.memory_space<vmem>>, %arg2: memref<1x128xf32, #tpu.memory_space<vmem>>, %arg3: memref<128x256xbf16, #tpu.memory_space<vmem>>, %arg4: memref<1x256xf32, #tpu.memory_space<vmem>>, %arg5: memref<2x256xf32, #tpu.memory_space<vmem>>, %arg6: memref<2x128xf32, #tpu.memory_space<vmem>>) attributes {dimension_semantics = [], scalar_prefetch = 0 : i64, scratch_operands = 0 : i64, tpu.core_type = #tpu.core_type<tc>} {
    %c0 = arith.constant 0 : index
    %c0_0 = arith.constant 0 : index
    %0 = vector.load %arg0[%c0, %c0_0] : memref<512x128xbf16, #tpu.memory_space<vmem>>, vector<512x128xbf16>
    %c0_1 = arith.constant 0 : index
    %c0_2 = arith.constant 0 : index
    %1 = vector.load %arg1[%c0_1, %c0_2] : memref<128x128xbf16, #tpu.memory_space<vmem>>, vector<128x128xbf16>
    %cst = arith.constant dense<0.000000e+00> : vector<512x128xf32>
    %2 = tpu.matmul %0, %1, %cst {dimension_numbers = #tpu.dot_dimension_numbers<[1], [0], [0], [1], [0, 0, 1, 1], [], []>} : vector<512x128xbf16>, vector<128x128xbf16>, vector<512x128xf32> -> vector<512x128xf32>
    %c0_3 = arith.constant 0 : index
    %c0_4 = arith.constant 0 : index
    %3 = vector.load %arg2[%c0_3, %c0_4] : memref<1x128xf32, #tpu.memory_space<vmem>>, vector<1x128xf32>
    %4 = vector.broadcast %3 : vector<1x128xf32> to vector<512x128xf32>
    %5 = arith.addf %2, %4 : vector<512x128xf32>
    %cst_5 = arith.constant 0.000000e+00 : f32
    %6 = vector.broadcast %cst_5 : f32 to vector<512x128xf32>
    %7 = arith.maximumf %5, %6 : vector<512x128xf32>
    %8 = vector.shape_cast %7 : vector<512x128xf32> to vector<2x256x128xf32>
    %cst_6 = arith.constant dense<0.000000e+00> : vector<2x128xf32>
    %9 = vector.multi_reduction <add>, %8, %cst_6 [1] : vector<2x256x128xf32> to vector<2x128xf32>
    %cst_7 = arith.constant 2.560000e+02 : f32
    %10 = vector.broadcast %cst_7 : f32 to vector<2x128xf32>
    %11 = arith.divf %9, %10 : vector<2x128xf32>
    %c0_8 = arith.constant 0 : index
    %c0_9 = arith.constant 0 : index
    %12 = vector.load %arg6[%c0_8, %c0_9] : memref<2x128xf32, #tpu.memory_space<vmem>>, vector<2x128xf32>
    tpu.vector_store %arg6[%c0_8, %c0_9], %11 {strides = array<i32>} : memref<2x128xf32, #tpu.memory_space<vmem>>, vector<2x128xf32>,
    %13 = arith.truncf %11 : vector<2x128xf32> to vector<2x128xbf16>
    %c0_10 = arith.constant 0 : index
    %c0_11 = arith.constant 0 : index
    %14 = vector.load %arg3[%c0_10, %c0_11] : memref<128x256xbf16, #tpu.memory_space<vmem>>, vector<128x256xbf16>
    %cst_12 = arith.constant dense<0.000000e+00> : vector<2x256xf32>
    %15 = tpu.matmul %13, %14, %cst_12 {dimension_numbers = #tpu.dot_dimension_numbers<[1], [0], [0], [1], [0, 0, 1, 1], [], []>} : vector<2x128xbf16>, vector<128x256xbf16>, vector<2x256xf32> -> vector<2x256xf32>
    %c0_13 = arith.constant 0 : index
    %c0_14 = arith.constant 0 : index
    %16 = vector.load %arg4[%c0_13, %c0_14] : memref<1x256xf32, #tpu.memory_space<vmem>>, vector<1x256xf32>
    %17 = vector.broadcast %16 : vector<1x256xf32> to vector<2x256xf32>
    %18 = arith.addf %15, %17 : vector<2x256xf32>
    %c0_15 = arith.constant 0 : index
    %c0_16 = arith.constant 0 : index
    %19 = vector.load %arg5[%c0_15, %c0_16] : memref<2x256xf32, #tpu.memory_space<vmem>>, vector<2x256xf32>
    tpu.vector_store %arg5[%c0_15, %c0_16], %18 {strides = array<i32>} : memref<2x256xf32, #tpu.memory_space<vmem>>, vector<2x256xf32>,
    return
  }
}

</mosaic_0001>

<llo_original>
// kernel: custom_model_forward.1
$region0: #{custom_model_forward.1}
  #allocation0 [shape = 'u32[]', space=smem, size = 0x4, offset = 0x4, fixed_abs, tag = 'smem constant byte address 0x4 - core index']
  #allocation1 [shape = 'u32[144,128]{1,0:T(1,128)}', space=vmem, size = 0x12000, scoped, tag = 'internal scratch']
  %s0 = inlined_call_operand.vmem [shape: bf16[512,128], index: 0, kind: input, shape index: {}]
  %s1 = inlined_call_operand.vmem [shape: bf16[128,128], index: 1, kind: input, shape index: {}]
  %s2 = inlined_call_operand.vmem [shape: f32[1,128], index: 2, kind: input, shape index: {}]
  %s3 = inlined_call_operand.vmem [shape: bf16[128,256], index: 3, kind: input, shape index: {}]
  %s4 = inlined_call_operand.vmem [shape: f32[1,256], index: 4, kind: input, shape index: {}]
  %s5 = inlined_call_operand.hbm [shape: f32[2,256], index: 5, kind: output, shape index: {0}]
  %s6 = inlined_call_operand.hbm [shape: f32[2,128], index: 6, kind: output, shape index: {1}]
  %7 = xla_tuple %s5, %s6
  %s8 = sld [smem:[#allocation0]]
  $region38: #{custom_model_forward.1} parent=0
    _
  %s10 = ssub.s32 1, %s8
  %s11 = scalar_select 0, %s10, %s8
  $region1: #{custom_model_forward.1} parent=0
    #allocation2 [shape = 'u8[2048]{0}', space=vmem, size = 0x800, scoped, tag = 'output window, operand 0, single buffered']
    #allocation3 [shape = 's32[1]{0}', space=sflag, size = 0x4, scoped, tag = 'scoped memory for custom_model_forward.1']
    #allocation4 [shape = 'u8[1024]{0}', space=vmem, size = 0x400, scoped, tag = 'output window, operand 1, single buffered']
    #allocation5 [shape = 's32[1]{0}', space=sflag, size = 0x4, scoped, tag = 'scoped memory for custom_model_forward.1']
    %12 = vsyncpa [#allocation3], 0
    %13 = vsyncpa [#allocation5], 0
    // Predicated region
    $region2: #{custom_model_forward.1} parent=1 // pred_check
      _
    $region3: #{custom_model_forward.1} parent=1 // pred_check_branch
      %15 = sbr.rel (0) target = $region5
    $region4: #{custom_model_forward.1} parent=1 // pred_region
      _
    $region5: #{custom_model_forward.1} parent=1 // pred_fallthru
      _
    // Predicated region
    $region6: #{custom_model_forward.1} parent=1 // pred_check
      _
    $region7: #{custom_model_forward.1} parent=1 // pred_check_branch
      %17 = sbr.rel (0) target = $region9
    $region8: #{custom_model_forward.1} parent=1 // pred_region
      _
    $region9: #{custom_model_forward.1} parent=1 // pred_fallthru
      _
    // Predicated region
    $region10: #{custom_model_forward.1} parent=1 // pred_check
      _
    $region11: #{custom_model_forward.1} parent=1 // pred_check_branch
      %19 = sbr.rel (0) target = $region13
    $region12: #{custom_model_forward.1} parent=1 // pred_region
      _
    $region13: #{custom_model_forward.1} parent=1 // pred_fallthru
      _
    // Predicated region
    $region14: #{custom_model_forward.1} parent=1 // pred_check
      _
    $region15: #{custom_model_forward.1} parent=1 // pred_check_branch
      %21 = sbr.rel (0) target = $region17
    $region16: #{custom_model_forward.1} parent=1 // pred_region
      _
    $region17: #{custom_model_forward.1} parent=1 // pred_fallthru
      _
    // Predicated region
    $region18: #{custom_model_forward.1} parent=1 // pred_check
      _
    $region19: #{custom_model_forward.1} parent=1 // pred_check_branch
      %23 = sbr.rel (0) target = $region21
    $region20: #{custom_model_forward.1} parent=1 // pred_region
      _
    $region21: #{custom_model_forward.1} parent=1 // pred_fallthru
      _
    %v25 = vld [vmem:[%s0] sm:$0xf]
    %v26 = vld [vmem:[%s0 + $0x4] sm:$0xf]
    %v27 = vld [vmem:[%s0 + $0x8] sm:$0xf]
    %v28 = vld [vmem:[%s0 + $0xc] sm:$0xf]
    %v29 = vld [vmem:[%s0 + $0x10] sm:$0xf]
    %v30 = vld [vmem:[%s0 + $0x14] sm:$0xf]
    %v31 = vld [vmem:[%s0 + $0x18] sm:$0xf]
    %v32 = vld [vmem:[%s0 + $0x1c] sm:$0xf]
    %v33 = vld [vmem:[%s0 + $0x20] sm:$0xf]
    %v34 = vld [vmem:[%s0 + $0x24] sm:$0xf]
    %v35 = vld [vmem:[%s0 + $0x28] sm:$0xf]
    %v36 = vld [vmem:[%s0 + $0x2c] sm:$0xf]
    %v37 = vld [vmem:[%s0 + $0x30] sm:$0xf]
    %v38 = vld [vmem:[%s0 + $0x34] sm:$0xf]
    %v39 = vld [vmem:[%s0 + $0x38] sm:$0xf]
    %v40 = vld [vmem:[%s0 + $0x3c] sm:$0xf]
    %v41 = vld [vmem:[%s0 + $0x40] sm:$0xf]
    %v42 = vld [vmem:[%s0 + $0x44] sm:$0xf]
    %v43 = vld [vmem:[%s0 + $0x48] sm:$0xf]
    %v44 = vld [vmem:[%s0 + $0x4c] sm:$0xf]
    %v45 = vld [vmem:[%s0 + $0x50] sm:$0xf]
    %v46 = vld [vmem:[%s0 + $0x54] sm:$0xf]
    %v47 = vld [vmem:[%s0 + $0x58] sm:$0xf]
    %v48 = vld [vmem:[%s0 + $0x5c] sm:$0xf]
    %v49 = vld [vmem:[%s0 + $0x60] sm:$0xf]
    %v50 = vld [vmem:[%s0 + $0x64] sm:$0xf]
    %v51 = vld [vmem:[%s0 + $0x68] sm:$0xf]
    %v52 = vld [vmem:[%s0 + $0x6c] sm:$0xf]
    %v53 = vld [vmem:[%s0 + $0x70] sm:$0xf]
    %v54 = vld [vmem:[%s0 + $0x74] sm:$0xf]
    %v55 = vld [vmem:[%s0 + $0x78] sm:$0xf]
    %v56 = vld [vmem:[%s0 + $0x7c] sm:$0xf]
    %v57 = vld [vmem:[%s0 + $0x80] sm:$0xf]
    %v58 = vld [vmem:[%s0 + $0x84] sm:$0xf]
    %v59 = vld [vmem:[%s0 + $0x88] sm:$0xf]
    %v60 = vld [vmem:[%s0 + $0x8c] sm:$0xf]
    %v61 = vld [vmem:[%s0 + $0x90] sm:$0xf]
    %v62 = vld [vmem:[%s0 + $0x94] sm:$0xf]
    %v63 = vld [vmem:[%s0 + $0x98] sm:$0xf]
    %v64 = vld [vmem:[%s0 + $0x9c] sm:$0xf]
    %v65 = vld [vmem:[%s0 + $0xa0] sm:$0xf]
    %v66 = vld [vmem:[%s0 + $0xa4] sm:$0xf]
    %v67 = vld [vmem:[%s0 + $0xa8] sm:$0xf]
    %v68 = vld [vmem:[%s0 + $0xac] sm:$0xf]
    %v69 = vld [vmem:[%s0 + $0xb0] sm:$0xf]
    %v70 = vld [vmem:[%s0 + $0xb4] sm:$0xf]
    %v71 = vld [vmem:[%s0 + $0xb8] sm:$0xf]
    %v72 = vld [vmem:[%s0 + $0xbc] sm:$0xf]
    %v73 = vld [vmem:[%s0 + $0xc0] sm:$0xf]
    %v74 = vld [vmem:[%s0 + $0xc4] sm:$0xf]
    %v75 = vld [vmem:[%s0 + $0xc8] sm:$0xf]
    %v76 = vld [vmem:[%s0 + $0xcc] sm:$0xf]
    %v77 = vld [vmem:[%s0 + $0xd0] sm:$0xf]
    %v78 = vld [vmem:[%s0 + $0xd4] sm:$0xf]
    %v79 = vld [vmem:[%s0 + $0xd8] sm:$0xf]
    %v80 = vld [vmem:[%s0 + $0xdc] sm:$0xf]
    %v81 = vld [vmem:[%s0 + $0xe0] sm:$0xf]
    %v82 = vld [vmem:[%s0 + $0xe4] sm:$0xf]
    %v83 = vld [vmem:[%s0 + $0xe8] sm:$0xf]
    %v84 = vld [vmem:[%s0 + $0xec] sm:$0xf]
    %v85 = vld [vmem:[%s0 + $0xf0] sm:$0xf]
    %v86 = vld [vmem:[%s0 + $0xf4] sm:$0xf]
    %v87 = vld [vmem:[%s0 + $0xf8] sm:$0xf]
    %v88 = vld [vmem:[%s0 + $0xfc] sm:$0xf]
    %v89 = vld [vmem:[%s1] sm:$0xf]
    %v90 = vld [vmem:[%s1 + $0x4] sm:$0xf]
    %v91 = vld [vmem:[%s1 + $0x8] sm:$0xf]
    %v92 = vld [vmem:[%s1 + $0xc] sm:$0xf]
    %v93 = vld [vmem:[%s1 + $0x10] sm:$0xf]
    %v94 = vld [vmem:[%s1 + $0x14] sm:$0xf]
    %v95 = vld [vmem:[%s1 + $0x18] sm:$0xf]
    %v96 = vld [vmem:[%s1 + $0x1c] sm:$0xf]
    %v97 = vld [vmem:[%s1 + $0x20] sm:$0xf]
    %v98 = vld [vmem:[%s1 + $0x24] sm:$0xf]
    %v99 = vld [vmem:[%s1 + $0x28] sm:$0xf]
    %v100 = vld [vmem:[%s1 + $0x2c] sm:$0xf]
    %v101 = vld [vmem:[%s1 + $0x30] sm:$0xf]
    %v102 = vld [vmem:[%s1 + $0x34] sm:$0xf]
    %v103 = vld [vmem:[%s1 + $0x38] sm:$0xf]
    %v104 = vld [vmem:[%s1 + $0x3c] sm:$0xf]
    %v105 = vld [vmem:[%s2] sm:$0x1]
    %v107 = vlaneseq
    %v108 = vshrl.u32 %v107, 7
    %v109 = vsub.s32 0, %v108
    %v110 = vrot.slane %v105, %v109
    %v176 = vunpack.c.l.b16 %v25
    %v177 = vunpack.c.l.b16 %v26
    %v178 = vunpack.c.l.b16 %v27
    %v179 = vunpack.c.l.b16 %v28
    %v180 = vunpack.c.l.b16 %v29
    %v181 = vunpack.c.l.b16 %v30
    %v182 = vunpack.c.l.b16 %v31
    %v183 = vunpack.c.l.b16 %v32
    %v184 = vunpack.c.l.b16 %v33
    %v185 = vunpack.c.l.b16 %v34
    %v186 = vunpack.c.l.b16 %v35
    %v187 = vunpack.c.l.b16 %v36
    %v188 = vunpack.c.l.b16 %v37
    %v189 = vunpack.c.l.b16 %v38
    %v190 = vunpack.c.l.b16 %v39
    %v191 = vunpack.c.l.b16 %v40
    %v192 = vunpack.c.l.b16 %v41
    %v193 = vunpack.c.l.b16 %v42
    %v194 = vunpack.c.l.b16 %v43
    %v195 = vunpack.c.l.b16 %v44
    %v196 = vunpack.c.l.b16 %v45
    %v197 = vunpack.c.l.b16 %v46
    %v198 = vunpack.c.l.b16 %v47
    %v199 = vunpack.c.l.b16 %v48
    %v200 = vunpack.c.l.b16 %v49
    %v201 = vunpack.c.l.b16 %v50
    %v202 = vunpack.c.l.b16 %v51
    %v203 = vunpack.c.l.b16 %v52
    %v204 = vunpack.c.l.b16 %v53
    %v205 = vunpack.c.l.b16 %v54
    %v206 = vunpack.c.l.b16 %v55
    %v207 = vunpack.c.l.b16 %v56
    %v208 = vunpack.c.l.b16 %v57
    %v209 = vunpack.c.l.b16 %v58
    %v210 = vunpack.c.l.b16 %v59
    %v211 = vunpack.c.l.b16 %v60
    %v212 = vunpack.c.l.b16 %v61
    %v213 = vunpack.c.l.b16 %v62
    %v214 = vunpack.c.l.b16 %v63
    %v215 = vunpack.c.l.b16 %v64
    %v216 = vunpack.c.l.b16 %v65
    %v217 = vunpack.c.l.b16 %v66
    %v218 = vunpack.c.l.b16 %v67
    %v219 = vunpack.c.l.b16 %v68
    %v220 = vunpack.c.l.b16 %v69
    %v221 = vunpack.c.l.b16 %v70
    %v222 = vunpack.c.l.b16 %v71
    %v223 = vunpack.c.l.b16 %v72
    %v224 = vunpack.c.l.b16 %v73
    %v225 = vunpack.c.l.b16 %v74
    %v226 = vunpack.c.l.b16 %v75
    %v227 = vunpack.c.l.b16 %v76
    %v228 = vunpack.c.l.b16 %v77
    %v229 = vunpack.c.l.b16 %v78
    %v230 = vunpack.c.l.b16 %v79
    %v231 = vunpack.c.l.b16 %v80
    %v232 = vunpack.c.l.b16 %v81
    %v233 = vunpack.c.l.b16 %v82
    %v234 = vunpack.c.l.b16 %v83
    %v235 = vunpack.c.l.b16 %v84
    %v236 = vunpack.c.l.b16 %v85
    %v237 = vunpack.c.l.b16 %v86
    %v238 = vunpack.c.l.b16 %v87
    %v239 = vunpack.c.l.b16 %v88
    %v240 = vpack.c.b16 %v177, %v176
    %v241 = vpack.c.b16 %v179, %v178
    %v242 = vpack.c.b16 %v181, %v180
    %v243 = vpack.c.b16 %v183, %v182
    %v244 = vpack.c.b16 %v185, %v184
    %v245 = vpack.c.b16 %v187, %v186
    %v246 = vpack.c.b16 %v189, %v188
    %v247 = vpack.c.b16 %v191, %v190
    %v248 = vpack.c.b16 %v193, %v192
    %v249 = vpack.c.b16 %v195, %v194
    %v250 = vpack.c.b16 %v197, %v196
    %v251 = vpack.c.b16 %v199, %v198
    %v252 = vpack.c.b16 %v201, %v200
    %v253 = vpack.c.b16 %v203, %v202
    %v254 = vpack.c.b16 %v205, %v204
    %v255 = vpack.c.b16 %v207, %v206
    %v256 = vpack.c.b16 %v209, %v208
    %v257 = vpack.c.b16 %v211, %v210
    %v258 = vpack.c.b16 %v213, %v212
    %v259 = vpack.c.b16 %v215, %v214
    %v260 = vpack.c.b16 %v217, %v216
    %v261 = vpack.c.b16 %v219, %v218
    %v262 = vpack.c.b16 %v221, %v220
    %v263 = vpack.c.b16 %v223, %v222
    %v264 = vpack.c.b16 %v225, %v224
    %v265 = vpack.c.b16 %v227, %v226
    %v266 = vpack.c.b16 %v229, %v228
    %v267 = vpack.c.b16 %v231, %v230
    %v268 = vpack.c.b16 %v233, %v232
    %v269 = vpack.c.b16 %v235, %v234
    %v270 = vpack.c.b16 %v237, %v236
    %v271 = vpack.c.b16 %v239, %v238
    %v320 = vunpack.c.l.b16 %v89
    %v321 = vunpack.c.l.b16 %v90
    %v322 = vunpack.c.l.b16 %v91
    %v323 = vunpack.c.l.b16 %v92
    %v324 = vunpack.c.l.b16 %v93
    %v325 = vunpack.c.l.b16 %v94
    %v326 = vunpack.c.l.b16 %v95
    %v327 = vunpack.c.l.b16 %v96
    %v328 = vunpack.c.l.b16 %v97
    %v329 = vunpack.c.l.b16 %v98
    %v330 = vunpack.c.l.b16 %v99
    %v331 = vunpack.c.l.b16 %v100
    %v332 = vunpack.c.l.b16 %v101
    %v333 = vunpack.c.l.b16 %v102
    %v334 = vunpack.c.l.b16 %v103
    %v335 = vunpack.c.l.b16 %v104
    %v336 = vpack.c.b16 %v321, %v320
    %v337 = vpack.c.b16 %v323, %v322
    %v338 = vpack.c.b16 %v325, %v324
    %v339 = vpack.c.b16 %v327, %v326
    %v340 = vpack.c.b16 %v329, %v328
    %v341 = vpack.c.b16 %v331, %v330
    %v342 = vpack.c.b16 %v333, %v332
    %v343 = vpack.c.b16 %v335, %v334
    %352 = vmatprep.subr.bf16.mxu0 0
    %353 = vmatpush1.bf16.msra.mxu0 %v343
    %354 = vmatprep.subr.bf16.mxu0 0
    %355 = vmatpush1.bf16.msra.mxu0 %v342
    %356 = vmatprep.subr.bf16.mxu0 0
    %357 = vmatpush1.bf16.msra.mxu0 %v341
    %358 = vmatprep.subr.bf16.mxu0 0
    %359 = vmatpush1.bf16.msra.mxu0 %v340
    %360 = vmatprep.subr.bf16.mxu0 0
    %361 = vmatpush1.bf16.msra.mxu0 %v339
    %362 = vmatprep.subr.bf16.mxu0 0
    %363 = vmatpush1.bf16.msra.mxu0 %v338
    %364 = vmatprep.subr.bf16.mxu0 0
    %365 = vmatpush1.bf16.msra.mxu0 %v337
    %366 = vmatprep.subr.bf16.mxu0 0
    %367 = vmatpush1.bf16.msra.mxu0 %v336
    %368 = vmatprep.subr.bf16.mxu0 0
    %369 = vmatpush2.bf16.msra.mxu0 0
    %370 = vmatprep.subr.bf16.mxu0 0
    %371 = vmatpush2.bf16.msra.mxu0 0
    %372 = vmatprep.subr.bf16.mxu0 0
    %373 = vmatpush2.bf16.msra.mxu0 0
    %374 = vmatprep.subr.bf16.mxu0 0
    %375 = vmatpush2.bf16.msra.mxu0 0
    %376 = vmatprep.subr.bf16.mxu0 0
    %377 = vmatpush2.bf16.msra.mxu0 0
    %378 = vmatprep.subr.bf16.mxu0 0
    %379 = vmatpush2.bf16.msra.mxu0 0
    %380 = vmatprep.subr.bf16.mxu0 0
    %381 = vmatpush2.bf16.msra.mxu0 0
    %382 = vmatprep.subr.bf16.mxu0 0
    %383 = vmatpush2.bf16.msra.mxu0 0
    %384 = vmatprep.mubr.bf16.mxu0 0
    %385 = vmatmul.mubr.bf16.gmra.mxu0 %v240
    %v386 = vpop.f32.mrf.mxu0
    %v387 = vadd.f32 %v110, %v386
    %v388 = vpop.f32.mrf.mxu0
    %v389 = vpop.f32.mrf.mxu0
    %v390 = vadd.f32 %v110, %v389
    %v391 = vpop.f32.mrf.mxu0
    %392 = vmatprep.mubr.bf16.mxu0 0
    %393 = vmatmul.mubr.bf16.gmra.mxu0 %v241
    %v394 = vpop.f32.mrf.mxu0
    %v395 = vadd.f32 %v110, %v394
    %v396 = vpop.f32.mrf.mxu0
    %v397 = vpop.f32.mrf.mxu0
    %v398 = vadd.f32 %v110, %v397
    %v399 = vpop.f32.mrf.mxu0
    %400 = vmatprep.mubr.bf16.mxu0 0
    %401 = vmatmul.mubr.bf16.gmra.mxu0 %v242
    %v402 = vpop.f32.mrf.mxu0
    %v403 = vadd.f32 %v110, %v402
    %v404 = vpop.f32.mrf.mxu0
    %v405 = vpop.f32.mrf.mxu0
    %v406 = vadd.f32 %v110, %v405
    %v407 = vpop.f32.mrf.mxu0
    %408 = vmatprep.mubr.bf16.mxu0 0
    %409 = vmatmul.mubr.bf16.gmra.mxu0 %v243
    %v410 = vpop.f32.mrf.mxu0
    %v411 = vadd.f32 %v110, %v410
    %v412 = vpop.f32.mrf.mxu0
    %v413 = vpop.f32.mrf.mxu0
    %v414 = vadd.f32 %v110, %v413
    %v415 = vpop.f32.mrf.mxu0
    %416 = vmatprep.mubr.bf16.mxu0 0
    %417 = vmatmul.mubr.bf16.gmra.mxu0 %v244
    %v418 = vpop.f32.mrf.mxu0
    %v419 = vadd.f32 %v110, %v418
    %v420 = vpop.f32.mrf.mxu0
    %v421 = vpop.f32.mrf.mxu0
    %v422 = vadd.f32 %v110, %v421
    %v423 = vpop.f32.mrf.mxu0
    %424 = vmatprep.mubr.bf16.mxu0 0
    %425 = vmatmul.mubr.bf16.gmra.mxu0 %v245
    %v426 = vpop.f32.mrf.mxu0
    %v427 = vadd.f32 %v110, %v426
    %v428 = vpop.f32.mrf.mxu0
    %v429 = vpop.f32.mrf.mxu0
    %v430 = vadd.f32 %v110, %v429
    %v431 = vpop.f32.mrf.mxu0
    %432 = vmatprep.mubr.bf16.mxu0 0
    %433 = vmatmul.mubr.bf16.gmra.mxu0 %v246
    %v434 = vpop.f32.mrf.mxu0
    %v435 = vadd.f32 %v110, %v434
    %v436 = vpop.f32.mrf.mxu0
    %v437 = vpop.f32.mrf.mxu0
    %v438 = vadd.f32 %v110, %v437
    %v439 = vpop.f32.mrf.mxu0
    %440 = vmatprep.mubr.bf16.mxu0 0
    %441 = vmatmul.mubr.bf16.gmra.mxu0 %v247
    %v442 = vpop.f32.mrf.mxu0
    %v443 = vadd.f32 %v110, %v442
    %v444 = vpop.f32.mrf.mxu0
    %v445 = vpop.f32.mrf.mxu0
    %v446 = vadd.f32 %v110, %v445
    %v447 = vpop.f32.mrf.mxu0
    %448 = vmatprep.mubr.bf16.mxu0 0
    %449 = vmatmul.mubr.bf16.gmra.mxu0 %v248
    %v450 = vpop.f32.mrf.mxu0
    %v451 = vadd.f32 %v110, %v450
    %v452 = vpop.f32.mrf.mxu0
    %v453 = vpop.f32.mrf.mxu0
    %v454 = vadd.f32 %v110, %v453
    %v455 = vpop.f32.mrf.mxu0
    %456 = vmatprep.mubr.bf16.mxu0 0
    %457 = vmatmul.mubr.bf16.gmra.mxu0 %v249
    %v458 = vpop.f32.mrf.mxu0
    %v459 = vadd.f32 %v110, %v458
    %v460 = vpop.f32.mrf.mxu0
    %v461 = vpop.f32.mrf.mxu0
    %v462 = vadd.f32 %v110, %v461
    %v463 = vpop.f32.mrf.mxu0
    %464 = vmatprep.mubr.bf16.mxu0 0
    %465 = vmatmul.mubr.bf16.gmra.mxu0 %v250
    %v466 = vpop.f32.mrf.mxu0
    %v467 = vadd.f32 %v110, %v466
    %v468 = vpop.f32.mrf.mxu0
    %v469 = vpop.f32.mrf.mxu0
    %v470 = vadd.f32 %v110, %v469
    %v471 = vpop.f32.mrf.mxu0
    %472 = vmatprep.mubr.bf16.mxu0 0
    %473 = vmatmul.mubr.bf16.gmra.mxu0 %v251
    %v474 = vpop.f32.mrf.mxu0
    %v475 = vadd.f32 %v110, %v474
    %v476 = vpop.f32.mrf.mxu0
    %v477 = vpop.f32.mrf.mxu0
    %v478 = vadd.f32 %v110, %v477
    %v479 = vpop.f32.mrf.mxu0
    %480 = vmatprep.mubr.bf16.mxu0 0
    %481 = vmatmul.mubr.bf16.gmra.mxu0 %v252
    %v482 = vpop.f32.mrf.mxu0
    %v483 = vadd.f32 %v110, %v482
    %v484 = vpop.f32.mrf.mxu0
    %v485 = vpop.f32.mrf.mxu0
    %v486 = vadd.f32 %v110, %v485
    %v487 = vpop.f32.mrf.mxu0
    %488 = vmatprep.mubr.bf16.mxu0 0
    %489 = vmatmul.mubr.bf16.gmra.mxu0 %v253
    %v490 = vpop.f32.mrf.mxu0
    %v491 = vadd.f32 %v110, %v490
    %v492 = vpop.f32.mrf.mxu0
    %v493 = vpop.f32.mrf.mxu0
    %v494 = vadd.f32 %v110, %v493
    %v495 = vpop.f32.mrf.mxu0
    %496 = vmatprep.mubr.bf16.mxu0 0
    %497 = vmatmul.mubr.bf16.gmra.mxu0 %v254
    %v498 = vpop.f32.mrf.mxu0
    %v499 = vadd.f32 %v110, %v498
    %v500 = vpop.f32.mrf.mxu0
    %v501 = vpop.f32.mrf.mxu0
    %v502 = vadd.f32 %v110, %v501
    %v503 = vpop.f32.mrf.mxu0
    %504 = vmatprep.mubr.bf16.mxu0 0
    %505 = vmatmul.mubr.bf16.gmra.mxu0 %v255
    %v506 = vpop.f32.mrf.mxu0
    %v507 = vadd.f32 %v110, %v506
    %v508 = vpop.f32.mrf.mxu0
    %v509 = vpop.f32.mrf.mxu0
    %v510 = vadd.f32 %v110, %v509
    %v511 = vpop.f32.mrf.mxu0
    %512 = vmatprep.mubr.bf16.mxu0 0
    %513 = vmatmul.mubr.bf16.gmra.mxu0 %v256
    %v514 = vpop.f32.mrf.mxu0
    %v515 = vadd.f32 %v110, %v514
    %v516 = vpop.f32.mrf.mxu0
    %v517 = vpop.f32.mrf.mxu0
    %v518 = vadd.f32 %v110, %v517
    %v519 = vpop.f32.mrf.mxu0
    %520 = vmatprep.mubr.bf16.mxu0 0
    %521 = vmatmul.mubr.bf16.gmra.mxu0 %v257
    %v522 = vpop.f32.mrf.mxu0
    %v523 = vadd.f32 %v110, %v522
    %v524 = vpop.f32.mrf.mxu0
    %v525 = vpop.f32.mrf.mxu0
    %v526 = vadd.f32 %v110, %v525
    %v527 = vpop.f32.mrf.mxu0
    %528 = vmatprep.mubr.bf16.mxu0 0
    %529 = vmatmul.mubr.bf16.gmra.mxu0 %v258
    %v530 = vpop.f32.mrf.mxu0
    %v531 = vadd.f32 %v110, %v530
    %v532 = vpop.f32.mrf.mxu0
    %v533 = vpop.f32.mrf.mxu0
    %v534 = vadd.f32 %v110, %v533
    %v535 = vpop.f32.mrf.mxu0
    %536 = vmatprep.mubr.bf16.mxu0 0
    %537 = vmatmul.mubr.bf16.gmra.mxu0 %v259
    %v538 = vpop.f32.mrf.mxu0
    %v539 = vadd.f32 %v110, %v538
    %v540 = vpop.f32.mrf.mxu0
    %v541 = vpop.f32.mrf.mxu0
    %v542 = vadd.f32 %v110, %v541
    %v543 = vpop.f32.mrf.mxu0
    %544 = vmatprep.mubr.bf16.mxu0 0
    %545 = vmatmul.mubr.bf16.gmra.mxu0 %v260
    %v546 = vpop.f32.mrf.mxu0
    %v547 = vadd.f32 %v110, %v546
    %v548 = vpop.f32.mrf.mxu0
    %v549 = vpop.f32.mrf.mxu0
    %v550 = vadd.f32 %v110, %v549
    %v551 = vpop.f32.mrf.mxu0
    %552 = vmatprep.mubr.bf16.mxu0 0
    %553 = vmatmul.mubr.bf16.gmra.mxu0 %v261
    %v554 = vpop.f32.mrf.mxu0
    %v555 = vadd.f32 %v110, %v554
    %v556 = vpop.f32.mrf.mxu0
    %v557 = vpop.f32.mrf.mxu0
    %v558 = vadd.f32 %v110, %v557
    %v559 = vpop.f32.mrf.mxu0
    %560 = vmatprep.mubr.bf16.mxu0 0
    %561 = vmatmul.mubr.bf16.gmra.mxu0 %v262
    %v562 = vpop.f32.mrf.mxu0
    %v563 = vadd.f32 %v110, %v562
    %v564 = vpop.f32.mrf.mxu0
    %v565 = vpop.f32.mrf.mxu0
    %v566 = vadd.f32 %v110, %v565
    %v567 = vpop.f32.mrf.mxu0
    %568 = vmatprep.mubr.bf16.mxu0 0
    %569 = vmatmul.mubr.bf16.gmra.mxu0 %v263
    %v570 = vpop.f32.mrf.mxu0
    %v571 = vadd.f32 %v110, %v570
    %v572 = vpop.f32.mrf.mxu0
    %v573 = vpop.f32.mrf.mxu0
    %v574 = vadd.f32 %v110, %v573
    %v575 = vpop.f32.mrf.mxu0
    %576 = vmatprep.mubr.bf16.mxu0 0
    %577 = vmatmul.mubr.bf16.gmra.mxu0 %v264
    %v578 = vpop.f32.mrf.mxu0
    %v579 = vadd.f32 %v110, %v578
    %v580 = vpop.f32.mrf.mxu0
    %v581 = vpop.f32.mrf.mxu0
    %v582 = vadd.f32 %v110, %v581
    %v583 = vpop.f32.mrf.mxu0
    %584 = vmatprep.mubr.bf16.mxu0 0
    %585 = vmatmul.mubr.bf16.gmra.mxu0 %v265
    %v586 = vpop.f32.mrf.mxu0
    %v587 = vadd.f32 %v110, %v586
    %v588 = vpop.f32.mrf.mxu0
    %v589 = vpop.f32.mrf.mxu0
    %v590 = vadd.f32 %v110, %v589
    %v591 = vpop.f32.mrf.mxu0
    %592 = vmatprep.mubr.bf16.mxu0 0
    %593 = vmatmul.mubr.bf16.gmra.mxu0 %v266
    %v594 = vpop.f32.mrf.mxu0
    %v595 = vadd.f32 %v110, %v594
    %v596 = vpop.f32.mrf.mxu0
    %v597 = vpop.f32.mrf.mxu0
    %v598 = vadd.f32 %v110, %v597
    %v599 = vpop.f32.mrf.mxu0
    %600 = vmatprep.mubr.bf16.mxu0 0
    %601 = vmatmul.mubr.bf16.gmra.mxu0 %v267
    %v602 = vpop.f32.mrf.mxu0
    %v603 = vadd.f32 %v110, %v602
    %v604 = vpop.f32.mrf.mxu0
    %v605 = vpop.f32.mrf.mxu0
    %v606 = vadd.f32 %v110, %v605
    %v607 = vpop.f32.mrf.mxu0
    %608 = vmatprep.mubr.bf16.mxu0 0
    %609 = vmatmul.mubr.bf16.gmra.mxu0 %v268
    %v610 = vpop.f32.mrf.mxu0
    %v611 = vadd.f32 %v110, %v610
    %v612 = vpop.f32.mrf.mxu0
    %v613 = vpop.f32.mrf.mxu0
    %v614 = vadd.f32 %v110, %v613
    %v615 = vpop.f32.mrf.mxu0
    %616 = vmatprep.mubr.bf16.mxu0 0
    %617 = vmatmul.mubr.bf16.gmra.mxu0 %v269
    %v618 = vpop.f32.mrf.mxu0
    %v619 = vadd.f32 %v110, %v618
    %v620 = vpop.f32.mrf.mxu0
    %v621 = vpop.f32.mrf.mxu0
    %v622 = vadd.f32 %v110, %v621
    %v623 = vpop.f32.mrf.mxu0
    %624 = vmatprep.mubr.bf16.mxu0 0
    %625 = vmatmul.mubr.bf16.gmra.mxu0 %v270
    %v626 = vpop.f32.mrf.mxu0
    %v627 = vadd.f32 %v110, %v626
    %v628 = vpop.f32.mrf.mxu0
    %v629 = vpop.f32.mrf.mxu0
    %v630 = vadd.f32 %v110, %v629
    %v631 = vpop.f32.mrf.mxu0
    %632 = vmatprep.mubr.bf16.mxu0 0
    %633 = vmatmul.mubr.bf16.gmra.mxu0 %v271
    %v634 = vpop.f32.mrf.mxu0
    %v635 = vadd.f32 %v110, %v634
    %v636 = vpop.f32.mrf.mxu0
    %v637 = vpop.f32.mrf.mxu0
    %v638 = vadd.f32 %v110, %v637
    %v639 = vpop.f32.mrf.mxu0
    %640 = vdwg.mxu0
    %v641 = vmax.f32 %v387, 0.0
    %v642 = vmax.f32 %v390, 0.0
    %v643 = vmax.f32 %v395, 0.0
    %v644 = vmax.f32 %v398, 0.0
    %v645 = vmax.f32 %v403, 0.0
    %v646 = vmax.f32 %v406, 0.0
    %v647 = vmax.f32 %v411, 0.0
    %v648 = vmax.f32 %v414, 0.0
    %v649 = vmax.f32 %v419, 0.0
    %v650 = vmax.f32 %v422, 0.0
    %v651 = vmax.f32 %v427, 0.0
    %v652 = vmax.f32 %v430, 0.0
    %v653 = vmax.f32 %v435, 0.0
    %v654 = vmax.f32 %v438, 0.0
    %v655 = vmax.f32 %v443, 0.0
    %v656 = vmax.f32 %v446, 0.0
    %v657 = vmax.f32 %v451, 0.0
    %v658 = vmax.f32 %v454, 0.0
    %v659 = vmax.f32 %v459, 0.0
    %v660 = vmax.f32 %v462, 0.0
    %v661 = vmax.f32 %v467, 0.0
    %v662 = vmax.f32 %v470, 0.0
    %v663 = vmax.f32 %v475, 0.0
    %v664 = vmax.f32 %v478, 0.0
    %v665 = vmax.f32 %v483, 0.0
    %v666 = vmax.f32 %v486, 0.0
    %v667 = vmax.f32 %v491, 0.0
    %v668 = vmax.f32 %v494, 0.0
    %v669 = vmax.f32 %v499, 0.0
    %v670 = vmax.f32 %v502, 0.0
    %v671 = vmax.f32 %v507, 0.0
    %v672 = vmax.f32 %v510, 0.0
    %v673 = vmax.f32 %v515, 0.0
    %v674 = vmax.f32 %v518, 0.0
    %v675 = vmax.f32 %v523, 0.0
    %v676 = vmax.f32 %v526, 0.0
    %v677 = vmax.f32 %v531, 0.0
    %v678 = vmax.f32 %v534, 0.0
    %v679 = vmax.f32 %v539, 0.0
    %v680 = vmax.f32 %v542, 0.0
    %v681 = vmax.f32 %v547, 0.0
    %v682 = vmax.f32 %v550, 0.0
    %v683 = vmax.f32 %v555, 0.0
    %v684 = vmax.f32 %v558, 0.0
    %v685 = vmax.f32 %v563, 0.0
    %v686 = vmax.f32 %v566, 0.0
    %v687 = vmax.f32 %v571, 0.0
    %v688 = vmax.f32 %v574, 0.0
    %v689 = vmax.f32 %v579, 0.0
    %v690 = vmax.f32 %v582, 0.0
    %v691 = vmax.f32 %v587, 0.0
    %v692 = vmax.f32 %v590, 0.0
    %v693 = vmax.f32 %v595, 0.0
    %v694 = vmax.f32 %v598, 0.0
    %v695 = vmax.f32 %v603, 0.0
    %v696 = vmax.f32 %v606, 0.0
    %v697 = vmax.f32 %v611, 0.0
    %v698 = vmax.f32 %v614, 0.0
    %v699 = vmax.f32 %v619, 0.0
    %v700 = vmax.f32 %v622, 0.0
    %v701 = vmax.f32 %v627, 0.0
    %v702 = vmax.f32 %v630, 0.0
    %v703 = vmax.f32 %v635, 0.0
    %v704 = vmax.f32 %v638, 0.0
    %v705 = vadd.f32 %v641, %v642
    %v706 = vadd.f32 %v705, %v643
    %v707 = vadd.f32 %v706, %v644
    %v708 = vadd.f32 %v707, %v645
    %v709 = vadd.f32 %v708, %v646
    %v710 = vadd.f32 %v709, %v647
    %v711 = vadd.f32 %v710, %v648
    %v712 = vadd.f32 %v711, %v649
    %v713 = vadd.f32 %v712, %v650
    %v714 = vadd.f32 %v713, %v651
    %v715 = vadd.f32 %v714, %v652
    %v716 = vadd.f32 %v715, %v653
    %v717 = vadd.f32 %v716, %v654
    %v718 = vadd.f32 %v717, %v655
    %v719 = vadd.f32 %v718, %v656
    %v720 = vadd.f32 %v719, %v657
    %v721 = vadd.f32 %v720, %v658
    %v722 = vadd.f32 %v721, %v659
    %v723 = vadd.f32 %v722, %v660
    %v724 = vadd.f32 %v723, %v661
    %v725 = vadd.f32 %v724, %v662
    %v726 = vadd.f32 %v725, %v663
    %v727 = vadd.f32 %v726, %v664
    %v728 = vadd.f32 %v727, %v665
    %v729 = vadd.f32 %v728, %v666
    %v730 = vadd.f32 %v729, %v667
    %v731 = vadd.f32 %v730, %v668
    %v732 = vadd.f32 %v731, %v669
    %v733 = vadd.f32 %v732, %v670
    %v734 = vadd.f32 %v733, %v671
    %v735 = vadd.f32 %v734, %v672
    %v736 = vrot.slane %v735, 4
    %v737 = vadd.f32 %v735, %v736
    %v738 = vrot.slane %v737, 2
    %v739 = vadd.f32 %v737, %v738
    %v740 = vrot.slane %v739, 1
    %v741 = vadd.f32 %v739, %v740
    %v742 = vadd.f32 %v673, %v674
    %v743 = vadd.f32 %v742, %v675
    %v744 = vadd.f32 %v743, %v676
    %v745 = vadd.f32 %v744, %v677
    %v746 = vadd.f32 %v745, %v678
    %v747 = vadd.f32 %v746, %v679
    %v748 = vadd.f32 %v747, %v680
    %v749 = vadd.f32 %v748, %v681
    %v750 = vadd.f32 %v749, %v682
    %v751 = vadd.f32 %v750, %v683
    %v752 = vadd.f32 %v751, %v684
    %v753 = vadd.f32 %v752, %v685
    %v754 = vadd.f32 %v753, %v686
    %v755 = vadd.f32 %v754, %v687
    %v756 = vadd.f32 %v755, %v688
    %v757 = vadd.f32 %v756, %v689
    %v758 = vadd.f32 %v757, %v690
    %v759 = vadd.f32 %v758, %v691
    %v760 = vadd.f32 %v759, %v692
    %v761 = vadd.f32 %v760, %v693
    %v762 = vadd.f32 %v761, %v694
    %v763 = vadd.f32 %v762, %v695
    %v764 = vadd.f32 %v763, %v696
    %v765 = vadd.f32 %v764, %v697
    %v766 = vadd.f32 %v765, %v698
    %v767 = vadd.f32 %v766, %v699
    %v768 = vadd.f32 %v767, %v700
    %v769 = vadd.f32 %v768, %v701
    %v770 = vadd.f32 %v769, %v702
    %v771 = vadd.f32 %v770, %v703
    %v772 = vadd.f32 %v771, %v704
    %v773 = vrot.slane %v772, 4
    %v774 = vadd.f32 %v772, %v773
    %v775 = vrot.slane %v774, 2
    %v776 = vadd.f32 %v774, %v775
    %v777 = vrot.slane %v776, 1
    %v778 = vadd.f32 %v776, %v777
    %v779 = vrcp.pop 256.0
    %v780 = vmul.f32 %v741, %v779
    %v781 = vmul.f32 %v778, %v779
    %vm784 = vcmask 1041409
    %v785 = vsel %vm784, %v781, %v780
    %787 = vst [vmem:[#allocation4] sm:$0x3] %v785
    %v788 = vpack.c.bf16 %v780, %v780
    %v789 = vpack.c.bf16 %v781, %v781
    %v790 = vld [vmem:[%s3] sm:$0xff]
    %v791 = vld [vmem:[%s3 + $0x8] sm:$0xff]
    %v792 = vld [vmem:[%s3 + $0x10] sm:$0xff]
    %v793 = vld [vmem:[%s3 + $0x18] sm:$0xff]
    %v794 = vld [vmem:[%s3 + $0x20] sm:$0xff]
    %v795 = vld [vmem:[%s3 + $0x28] sm:$0xff]
    %v796 = vld [vmem:[%s3 + $0x30] sm:$0xff]
    %v797 = vld [vmem:[%s3 + $0x38] sm:$0xff]
    %v798 = vld [vmem:[%s3 + $0x40] sm:$0xff]
    %v799 = vld [vmem:[%s3 + $0x48] sm:$0xff]
    %v800 = vld [vmem:[%s3 + $0x50] sm:$0xff]
    %v801 = vld [vmem:[%s3 + $0x58] sm:$0xff]
    %v802 = vld [vmem:[%s3 + $0x60] sm:$0xff]
    %v803 = vld [vmem:[%s3 + $0x68] sm:$0xff]
    %v804 = vld [vmem:[%s3 + $0x70] sm:$0xff]
    %v805 = vld [vmem:[%s3 + $0x78] sm:$0xff]
    %v806 = vld [vmem:[%s4] sm:$0x3]
    %v808 = vlaneseq
    %v809 = vshrl.u32 %v808, 7
    %v810 = vsub.s32 0, %v809
    %v811 = vrot.slane %v806, %v810
    %v812 = vlaneseq
    %v813 = vshrl.u32 %v812, 7
    %v814 = vsub.s32 1, %v813
    %v815 = vrot.slane %v806, %v814
    %v820 = vunpack.c.l.b16 %v788
    %v821 = vunpack.c.l.b16 %v789
    %v822 = vsel %vm784, %v821, %v820
    %v823 = vpack.c.b16 %v822, %v822
    %v841 = vunpack.c.l.b16 %v790
    %v842 = vunpack.c.h.b16 %v790
    %v843 = vunpack.c.l.b16 %v791
    %v844 = vunpack.c.h.b16 %v791
    %v845 = vunpack.c.l.b16 %v792
    %v846 = vunpack.c.h.b16 %v792
    %v847 = vunpack.c.l.b16 %v793
    %v848 = vunpack.c.h.b16 %v793
    %v849 = vunpack.c.l.b16 %v794
    %v850 = vunpack.c.h.b16 %v794
    %v851 = vunpack.c.l.b16 %v795
    %v852 = vunpack.c.h.b16 %v795
    %v853 = vunpack.c.l.b16 %v796
    %v854 = vunpack.c.h.b16 %v796
    %v855 = vunpack.c.l.b16 %v797
    %v856 = vunpack.c.h.b16 %v797
    %v857 = vunpack.c.l.b16 %v798
    %v858 = vunpack.c.h.b16 %v798
    %v859 = vunpack.c.l.b16 %v799
    %v860 = vunpack.c.h.b16 %v799
    %v861 = vunpack.c.l.b16 %v800
    %v862 = vunpack.c.h.b16 %v800
    %v863 = vunpack.c.l.b16 %v801
    %v864 = vunpack.c.h.b16 %v801
    %v865 = vunpack.c.l.b16 %v802
    %v866 = vunpack.c.h.b16 %v802
    %v867 = vunpack.c.l.b16 %v803
    %v868 = vunpack.c.h.b16 %v803
    %v869 = vunpack.c.l.b16 %v804
    %v870 = vunpack.c.h.b16 %v804
    %v871 = vunpack.c.l.b16 %v805
    %v872 = vunpack.c.h.b16 %v805
    %v873 = vpack.c.b16 %v843, %v841
    %v874 = vpack.c.b16 %v844, %v842
    %v875 = vpack.c.b16 %v847, %v845
    %v876 = vpack.c.b16 %v848, %v846
    %v877 = vpack.c.b16 %v851, %v849
    %v878 = vpack.c.b16 %v852, %v850
    %v879 = vpack.c.b16 %v855, %v853
    %v880 = vpack.c.b16 %v856, %v854
    %v881 = vpack.c.b16 %v859, %v857
    %v882 = vpack.c.b16 %v860, %v858
    %v883 = vpack.c.b16 %v863, %v861
    %v884 = vpack.c.b16 %v864, %v862
    %v885 = vpack.c.b16 %v867, %v865
    %v886 = vpack.c.b16 %v868, %v866
    %v887 = vpack.c.b16 %v871, %v869
    %v888 = vpack.c.b16 %v872, %v870
    %905 = vmatprep.subr.bf16.mxu0 %v888
    %906 = vmatpush1.bf16.msra.mxu0 %v887
    %907 = vmatprep.subr.bf16.mxu0 %v886
    %908 = vmatpush1.bf16.msra.mxu0 %v885
    %909 = vmatprep.subr.bf16.mxu0 %v884
    %910 = vmatpush1.bf16.msra.mxu0 %v883
    %911 = vmatprep.subr.bf16.mxu0 %v882
    %912 = vmatpush1.bf16.msra.mxu0 %v881
    %913 = vmatprep.subr.bf16.mxu0 %v880
    %914 = vmatpush1.bf16.msra.mxu0 %v879
    %915 = vmatprep.subr.bf16.mxu0 %v878
    %916 = vmatpush1.bf16.msra.mxu0 %v877
    %917 = vmatprep.subr.bf16.mxu0 %v876
    %918 = vmatpush1.bf16.msra.mxu0 %v875
    %919 = vmatprep.subr.bf16.mxu0 %v874
    %920 = vmatpush1.bf16.msra.mxu0 %v873
    %921 = vmatprep.subr.bf16.mxu0 0
    %922 = vmatpush2.bf16.msra.mxu0 0
    %923 = vmatprep.subr.bf16.mxu0 0
    %924 = vmatpush2.bf16.msra.mxu0 0
    %925 = vmatprep.subr.bf16.mxu0 0
    %926 = vmatpush2.bf16.msra.mxu0 0
    %927 = vmatprep.subr.bf16.mxu0 0
    %928 = vmatpush2.bf16.msra.mxu0 0
    %929 = vmatprep.subr.bf16.mxu0 0
    %930 = vmatpush2.bf16.msra.mxu0 0
    %931 = vmatprep.subr.bf16.mxu0 0
    %932 = vmatpush2.bf16.msra.mxu0 0
    %933 = vmatprep.subr.bf16.mxu0 0
    %934 = vmatpush2.bf16.msra.mxu0 0
    %935 = vmatprep.subr.bf16.mxu0 0
    %936 = vmatpush2.bf16.msra.mxu0 0
    %937 = vmatprep.mubr.bf16.mxu0 0
    %938 = vmatmul.mubr.bf16.gmra.mxu0 %v823
    %v939 = vpop.f32.mrf.mxu0
    %v940 = vadd.f32 %v811, %v939
    %v941 = vpop.f32.mrf.mxu0
    %v942 = vadd.f32 %v815, %v941
    %v943 = vpop.f32.mrf.mxu0
    %v944 = vpop.f32.mrf.mxu0
    %945 = vdwg.mxu0
    %v948 = vcombine.low %v940, %v942
    %v950 = vunpack.c.l.s4 1983009808
    %v951 = vunpack.c.0.s8 %v950
    %v952 = vlaneseq
    %v953 = vshrl.u32 %v952, 7
    %v954 = vsub.s32 %v951, %v953
    %v955 = vrot.slane %v948, %v954
    %957 = vst [vmem:[#allocation2] sm:$0xf] %v955
    // Predicated region
    $region22: #{custom_model_forward.1} parent=1 // pred_check
      _
    $region23: #{custom_model_forward.1} parent=1 // pred_check_branch
      %959 = sbr.rel (0) target = $region25
    $region24: #{custom_model_forward.1} parent=1 // pred_region
      %s961 = ssub.s32 64, 64
      %962 = vsyncadd [#allocation3], %s961
      %s964 = sshll.u32 [#allocation2], 4
      %s965 = int_to_ptr.vmem [resolvable:$true] %s964
      %967 = dma.vmem_to_hbm [thread:$0]  %s965, 64, %s5, [#allocation3]
    $region25: #{custom_model_forward.1} parent=1 // pred_fallthru
      _
    // Predicated region
    $region26: #{custom_model_forward.1} parent=1 // pred_check
      _
    $region27: #{custom_model_forward.1} parent=1 // pred_check_branch
      %969 = sbr.rel (0) target = $region29
    $region28: #{custom_model_forward.1} parent=1 // pred_region
      %s971 = ssub.s32 32, 32
      %972 = vsyncadd [#allocation5], %s971
      %s974 = sshll.u32 [#allocation4], 4
      %s975 = int_to_ptr.vmem [resolvable:$true] %s974
      %977 = dma.vmem_to_hbm [thread:$0]  %s975, 32, %s6, [#allocation5]
    $region29: #{custom_model_forward.1} parent=1 // pred_fallthru
      _
    // Predicated region
    $region30: #{custom_model_forward.1} parent=1 // pred_check
      _
    $region31: #{custom_model_forward.1} parent=1 // pred_check_branch
      %979 = sbr.rel (0) target = $region33
    $region32: #{custom_model_forward.1} parent=1 // pred_region
      %980 = dma.done [#allocation3], 64
    $region33: #{custom_model_forward.1} parent=1 // pred_fallthru
      _
    // Predicated region
    $region34: #{custom_model_forward.1} parent=1 // pred_check
      _
    $region35: #{custom_model_forward.1} parent=1 // pred_check_branch
      %982 = sbr.rel (0) target = $region37
    $region36: #{custom_model_forward.1} parent=1 // pred_region
      %983 = dma.done [#allocation5], 32
    $region37: #{custom_model_forward.1} parent=1 // pred_fallthru
      _
    %984 = vsyncpa [#allocation3], 1
    %985 = vsyncpa [#allocation5], 1

</llo_original>
